<compile_context>
chip_gen: v7x
topology: tpu7x:2x2x1
jax: 0.10.0
libtpu: 0.0.40
codegen_flags: <defaults>
</compile_context>

<pallas_src>
import functools

import jax
import jax.numpy as jnp
from jax.experimental import pallas as pl
from jax.experimental.pallas import tpu as pltpu


def _round_up(v, m):
    return ((v + m - 1) // m) * m


def _vmem_capacity_bytes():
    """Physical VMEM per TensorCore; conservative fallback if the query fails."""
    try:
        info = pltpu.get_tpu_info()
        cap = getattr(info, "vmem_capacity_bytes", None)
        if cap:
            return int(cap)
    except Exception:
        pass
    return 64 * 1024 * 1024  # v7x per-core size: safe lower bound everywhere


def _invariant_block_spec(shape, index_map):
    """Grid-invariant block: single-buffer it (it is only DMA'd once)."""
    try:
        return pl.BlockSpec(shape, index_map, pipeline_mode=pl.Buffered(1))
    except TypeError:  # older BlockSpec signature without pipeline_mode
        return pl.BlockSpec(shape, index_map)


def _jacobikan_kernel(x_ref, w_ref, bias_ref, o_ref, p_ref, *, degree, a, b):
    # x_ref   : (TB, I_pad)            input dtype
    # w_ref   : (K = degree*I_pad, TN) compute dtype (bf16 by default)
    # bias_ref: (1, TN)                f32  (degree-0 + const(degree-1) fold)
    # o_ref   : (TB, TN)               output dtype (TN % 128 == 0 -> unmasked vst)
    # p_ref   : (TB, K)  VMEM scratch, compute dtype -- Jacobi basis; persists
    #                    across the output-tile grid axis j.
    I = x_ref.shape[1]
    cdt = w_ref.dtype

    # Build the Jacobi basis only for the first output tile of each batch block;
    # remaining j-tiles of the same batch block reuse the persistent scratch.
    @pl.when(pl.program_id(1) == 0)
    def _():
        # Recurrence in f32 on the VPU (safe on v5e: no bf16 VPU); downcast only
        # when staging slabs into the MXU-operand scratch.
        x = jnp.tanh(x_ref[...].astype(jnp.float32))          # (TB, I_pad)

        # Degree-1 slab is raw tanh(x): (a+b+2)/2 lives in W's rows, (a-b)/2 in the
        # bias, and the whole degree-0 slab became the bias.  Slab offsets are
        # multiples of I_pad (multiple of 128) -> lane-aligned, unmasked stores.
        p_ref[:, 0:I] = x.astype(cdt)

        if degree >= 2:
            p_km1 = jnp.ones_like(x)                           # P_0
            p_k = (a - b + (a + b + 2.0) * x) * 0.5            # P_1 (unscaled form)
            for i in range(2, degree + 1):
                theta_k = (2 * i + a + b) * (2 * i + a + b - 1) / (2 * i * (i + a + b))
                theta_k1 = ((2 * i + a + b - 1) * (a * a - b * b)
                            / (2 * i * (i + a + b) * (2 * i + a + b - 2)))
                theta_k2 = ((i + a - 1) * (i + b - 1) * (2 * i + a + b)
                            / (i * (i + a + b) * (2 * i + a + b - 2)))
                t = theta_k * x
                if theta_k1 != 0.0:            # a == b (default) -> skip the add
                    t = t + theta_k1
                p_next = t * p_k - theta_k2 * p_km1
                p_ref[:, (i - 1) * I:i * I] = p_next.astype(cdt)
                p_km1, p_k = p_k, p_next

    # One MXU matmul over K = degree*I_pad with f32 accumulation, plus the bias.
    acc = jnp.dot(p_ref[...], w_ref[...], preferred_element_type=jnp.float32)
    o_ref[...] = (acc + bias_ref[...]).astype(o_ref.dtype)


def jacobikan_forward(x, jacobi_coeffs, *, degree, a=1.0, b=1.0,
                      compute_dtype=jnp.bfloat16):
    """x: (..., input_dim); jacobi_coeffs: (input_dim, output_dim, degree+1)."""
    a = float(a)
    b = float(b)
    input_dim, output_dim, dp1 = jacobi_coeffs.shape
    assert dp1 == degree + 1

    x2 = jnp.reshape(x, (-1, input_dim))                       # (B, I)
    B = x2.shape[0]
    out_dtype = x2.dtype

    coeffs = jacobi_coeffs.astype(jnp.float32)                 # (I, O, D+1)
    o_pad = _round_up(output_dim, 128)                         # lane-dense output
    i_pad = _round_up(input_dim, 128)                          # lane-aligned slabs

    # Bias fold: P_0 == 1 and the constant part of P_1 become a per-output bias.
    bias = jnp.sum(coeffs[:, :, 0], axis=0)                    # (O,)
    if degree > 0:
        bias = bias + 0.5 * (a - b) * jnp.sum(coeffs[:, :, 1], axis=0)
    bias = jnp.pad(bias, (0, o_pad - output_dim)).reshape(1, o_pad)

    if degree == 0:
        # Degenerate layer: every output row equals the bias (no matmul needed).
        return jnp.broadcast_to(bias[:, :output_dim], (B, output_dim)).astype(out_dtype)

    # (I, O, D+1) -> slabs [W_1', W_2, ..., W_D] with the degree axis folded into
    # the matmul contraction.  W_1 absorbs the (a+b+2)/2 scale of P_1; I and O are
    # zero-padded so slab stores and output stores are lane-aligned / lane-dense.
    w_dio = jnp.transpose(coeffs[:, :, 1:], (2, 0, 1))         # (D, I, O)
    w_dio = w_dio.at[0].multiply(0.5 * (a + b + 2.0))
    w_dio = jnp.pad(w_dio, ((0, 0), (0, i_pad - input_dim), (0, o_pad - output_dim)))
    K = degree * i_pad
    w = w_dio.reshape(K, o_pad).astype(compute_dtype)

    x2p = x2 if i_pad == input_dim else jnp.pad(x2, ((0, 0), (0, i_pad - input_dim)))

    itemsize_x = jnp.dtype(x2p.dtype).itemsize
    itemsize_out = jnp.dtype(out_dtype).itemsize
    itemsize_c = jnp.dtype(compute_dtype).itemsize

    # ---- generation-aware VMEM budget --------------------------------------
    vmem_cap = _vmem_capacity_bytes()               # 128 MiB v5e/v6e, 64 MiB v7x
    vmem_limit = min(vmem_cap * 3 // 4, 96 * 1024 * 1024)
    budget = vmem_limit * 4 // 5                    # headroom for compiler scratch

    # ---- output-column tiling: keep W inside ~1/3 of the budget -------------
    w_share = budget // 3
    if K * o_pad * itemsize_c <= w_share:
        tn = o_pad                                  # grid-invariant W, 1 buffer
        w_spec = _invariant_block_spec((K, tn), lambda i, j: (0, j))
        w_buffers = 1
    else:
        tn = min(o_pad, 1024)
        while tn > 128 and 2 * K * tn * itemsize_c > w_share:
            tn -= 128
        w_spec = pl.BlockSpec((K, tn), lambda i, j: (0, j))   # streamed, 2 buffers
        w_buffers = 2

    # ---- batch tile ----------------------------------------------------------
    fixed = w_buffers * K * tn * itemsize_c + 2 * tn * 4       # W + bias
    per_row = (2 * i_pad * itemsize_x        # x (double-buffered)
               + 2 * tn * itemsize_out       # out (double-buffered)
               + K * itemsize_c)             # P scratch
    rows = max((budget - fixed) // per_row, 8)
    block_b = min(B, 1024, int(rows))
    if B >= 16:
        # >= 2 grid steps over batch so the "parallel" axis can shard across the
        # two TensorCores on v7x (negligible extra-step cost on 1-TC chips).
        block_b = min(block_b, _round_up(pl.cdiv(B, 2), 8))
    if block_b < B:
        block_b = max(8, (block_b // 8) * 8)

    grid = (pl.cdiv(B, block_b), pl.cdiv(o_pad, tn))
    kernel = functools.partial(_jacobikan_kernel, degree=degree, a=a, b=b)

    out = pl.pallas_call(
        kernel,
        out_shape=jax.ShapeDtypeStruct((B, o_pad), out_dtype),
        grid_spec=pltpu.PrefetchScalarGridSpec(
            num_scalar_prefetch=0,
            grid=grid,
            in_specs=[
                pl.BlockSpec((block_b, i_pad), lambda i, j: (i, 0)),
                w_spec,
                pl.BlockSpec((1, tn), lambda i, j: (0, j)),
            ],
            out_specs=pl.BlockSpec((block_b, tn), lambda i, j: (i, j)),
            scratch_shapes=[pltpu.VMEM((block_b, K), compute_dtype)],
        ),
        compiler_params=pltpu.CompilerParams(
            dimension_semantics=("parallel", "arbitrary"),
            vmem_limit_bytes=int(vmem_limit),
        ),
    )(x2p, w, bias)

    return out[:, :output_dim]


def _reference_forward(x, jacobi_coeffs, *, degree, a=1.0, b=1.0):
    """Pure-JAX f32 reference matching the PyTorch forward."""
    input_dim = jacobi_coeffs.shape[0]
    x2 = jnp.tanh(jnp.reshape(x, (-1, input_dim)).astype(jnp.float32))
    B = x2.shape[0]
    polys = [jnp.ones((B, input_dim), jnp.float32)]
    if degree > 0:
        polys.append((a - b + (a + b + 2.0) * x2) / 2.0)
    for i in range(2, degree + 1):
        theta_k = (2 * i + a + b) * (2 * i + a + b - 1) / (2 * i * (i + a + b))
        theta_k1 = ((2 * i + a + b - 1) * (a * a - b * b)
                    / (2 * i * (i + a + b) * (2 * i + a + b - 2)))
        theta_k2 = ((i + a - 1) * (i + b - 1) * (2 * i + a + b)
                    / (i * (i + a + b) * (2 * i + a + b - 2)))
        polys.append((theta_k * x2 + theta_k1) * polys[-1] - theta_k2 * polys[-2])
    jacobi = jnp.stack(polys, axis=-1)                          # (B, I, D+1)
    return jnp.einsum('bid,iod->bo', jacobi, jacobi_coeffs.astype(jnp.float32))


if __name__ == "__main__":
    # Module hyperparameters (small, deterministic).
    input_dim, output_dim, degree = 32, 16, 4
    a_param, b_param = 1.0, 1.0

    key = jax.random.PRNGKey(0)
    kx, kw = jax.random.split(key)

    # Input: leading dims arbitrary (forward flattens to (-1, input_dim)).
    x = jax.random.normal(kx, (2, 4, input_dim), dtype=jnp.float32)

    # Parameter init matching nn.init.normal_(mean=0, std=1/(input_dim*(degree+1))).
    std = 1.0 / (input_dim * (degree + 1))
    jacobi_coeffs = std * jax.random.normal(
        kw, (input_dim, output_dim, degree + 1), dtype=jnp.float32)

    y_ref = _reference_forward(x, jacobi_coeffs, degree=degree, a=a_param, b=b_param)

    # f32 MXU-operand path: matches the reference tightly.
    y_f32 = jacobikan_forward(x, jacobi_coeffs, degree=degree, a=a_param, b=b_param,
                              compute_dtype=jnp.float32)
    y_f32 = jax.block_until_ready(y_f32)
    assert y_f32.shape == (8, output_dim)
    assert jnp.allclose(y_f32, y_ref, atol=1e-5, rtol=1e-5), "f32 mismatch vs reference"

    # Default bf16 MXU-operand path (f32 accumulation): bf16 operand rounding only.
    y_bf16 = jacobikan_forward(x, jacobi_coeffs, degree=degree, a=a_param, b=b_param)
    y_bf16 = jax.block_until_ready(y_bf16)
    assert y_bf16.shape == (8, output_dim)
    assert jnp.allclose(y_bf16, y_ref, atol=1e-2, rtol=1e-2), "bf16 mismatch vs reference"

    print("KERNEL_OK")
</pallas_src>

<mosaic_0001>
module attributes {stable_mosaic.version = 11 : i64} {
  func.func @_jacobikan_kernel(%arg0: i32, %arg1: i32, %arg2: memref<8x128xf32, #tpu.memory_space<vmem>>, %arg3: memref<512x128xf32, #tpu.memory_space<vmem>>, %arg4: memref<1x128xf32, #tpu.memory_space<vmem>>, %arg5: memref<8x128xf32, #tpu.memory_space<vmem>>, %arg6: memref<8x512xf32, #tpu.memory_space<vmem>>) attributes {dimension_semantics = [#tpu.dimension_semantics<parallel>, #tpu.dimension_semantics<arbitrary>], iteration_bounds = array<i64: 1, 1>, scalar_prefetch = 0 : i64, scratch_operands = 1 : i64, tpu.core_type = #tpu.core_type<tc>, window_params = [{transform_indices = @transform_0, window_bounds = array<i64: 8, 128>}, {pipeline_mode = #tpu.pipeline_mode<synchronous>, transform_indices = @transform_1, window_bounds = array<i64: 512, 128>}, {transform_indices = @transform_2, window_bounds = array<i64: 1, 128>}, {transform_indices = @transform_3, window_bounds = array<i64: 8, 128>}]} {
    %c0_i32 = arith.constant 0 : i32
    %0 = arith.cmpi eq, %arg1, %c0_i32 : i32
    %1 = arith.extui %0 : i1 to i32
    %c0_i32_0 = arith.constant 0 : i32
    %2 = arith.cmpi ne, %1, %c0_i32_0 : i32
    scf.if %2 {
      %c0_8 = arith.constant 0 : index
      %c0_9 = arith.constant 0 : index
      %10 = vector.load %arg2[%c0_8, %c0_9] : memref<8x128xf32, #tpu.memory_space<vmem>>, vector<8x128xf32>
      %11 = math.tanh %10 : vector<8x128xf32>
      %c0_10 = arith.constant 0 : index
      %c0_11 = arith.constant 0 : index
      %12 = vector.load %arg6[%c0_10, %c0_11] : memref<8x512xf32, #tpu.memory_space<vmem>>, vector<8x128xf32>
      tpu.vector_store %arg6[%c0_10, %c0_11], %11 {strides = array<i32>} : memref<8x512xf32, #tpu.memory_space<vmem>>, vector<8x128xf32>,
      %cst_12 = arith.constant 1.000000e+00 : f32
      %13 = vector.broadcast %cst_12 : f32 to vector<8x128xf32>
      %cst_13 = arith.constant 4.000000e+00 : f32
      %14 = vector.broadcast %cst_13 : f32 to vector<8x128xf32>
      %15 = arith.mulf %14, %11 : vector<8x128xf32>
      %cst_14 = arith.constant 0.000000e+00 : f32
      %16 = vector.broadcast %cst_14 : f32 to vector<8x128xf32>
      %17 = arith.addf %16, %15 : vector<8x128xf32>
      %cst_15 = arith.constant 5.000000e-01 : f32
      %18 = vector.broadcast %cst_15 : f32 to vector<8x128xf32>
      %19 = arith.mulf %17, %18 : vector<8x128xf32>
      %cst_16 = arith.constant 1.875000e+00 : f32
      %20 = vector.broadcast %cst_16 : f32 to vector<8x128xf32>
      %21 = arith.mulf %20, %11 : vector<8x128xf32>
      %22 = arith.mulf %21, %19 : vector<8x128xf32>
      %cst_17 = arith.constant 7.500000e-01 : f32
      %23 = vector.broadcast %cst_17 : f32 to vector<8x128xf32>
      %24 = arith.mulf %23, %13 : vector<8x128xf32>
      %25 = arith.subf %22, %24 : vector<8x128xf32>
      %c0_18 = arith.constant 0 : index
      %c128 = arith.constant 128 : index
      %26 = vector.load %arg6[%c0_18, %c128] : memref<8x512xf32, #tpu.memory_space<vmem>>, vector<8x128xf32>
      tpu.vector_store %arg6[%c0_18, %c128], %25 {strides = array<i32>} : memref<8x512xf32, #tpu.memory_space<vmem>>, vector<8x128xf32>,
      %cst_19 = arith.constant 1.86666667 : f32
      %27 = vector.broadcast %cst_19 : f32 to vector<8x128xf32>
      %28 = arith.mulf %27, %11 : vector<8x128xf32>
      %29 = arith.mulf %28, %25 : vector<8x128xf32>
      %cst_20 = arith.constant 8.000000e-01 : f32
      %30 = vector.broadcast %cst_20 : f32 to vector<8x128xf32>
      %31 = arith.mulf %30, %19 : vector<8x128xf32>
      %32 = arith.subf %29, %31 : vector<8x128xf32>
      %c0_21 = arith.constant 0 : index
      %c256 = arith.constant 256 : index
      %33 = vector.load %arg6[%c0_21, %c256] : memref<8x512xf32, #tpu.memory_space<vmem>>, vector<8x128xf32>
      tpu.vector_store %arg6[%c0_21, %c256], %32 {strides = array<i32>} : memref<8x512xf32, #tpu.memory_space<vmem>>, vector<8x128xf32>,
      %cst_22 = arith.constant 1.875000e+00 : f32
      %34 = vector.broadcast %cst_22 : f32 to vector<8x128xf32>
      %35 = arith.mulf %34, %11 : vector<8x128xf32>
      %36 = arith.mulf %35, %32 : vector<8x128xf32>
      %cst_23 = arith.constant 0.833333313 : f32
      %37 = vector.broadcast %cst_23 : f32 to vector<8x128xf32>
      %38 = arith.mulf %37, %25 : vector<8x128xf32>
      %39 = arith.subf %36, %38 : vector<8x128xf32>
      %c0_24 = arith.constant 0 : index
      %c384 = arith.constant 384 : index
      %40 = vector.load %arg6[%c0_24, %c384] : memref<8x512xf32, #tpu.memory_space<vmem>>, vector<8x128xf32>
      tpu.vector_store %arg6[%c0_24, %c384], %39 {strides = array<i32>} : memref<8x512xf32, #tpu.memory_space<vmem>>, vector<8x128xf32>,
    } else {
    }
    %c0 = arith.constant 0 : index
    %c0_1 = arith.constant 0 : index
    %3 = vector.load %arg6[%c0, %c0_1] : memref<8x512xf32, #tpu.memory_space<vmem>>, vector<8x512xf32>
    %c0_2 = arith.constant 0 : index
    %c0_3 = arith.constant 0 : index
    %4 = vector.load %arg3[%c0_2, %c0_3] : memref<512x128xf32, #tpu.memory_space<vmem>>, vector<512x128xf32>
    %cst = arith.constant dense<0.000000e+00> : vector<8x128xf32>
    %5 = tpu.matmul %3, %4, %cst {dimension_numbers = #tpu.dot_dimension_numbers<[1], [0], [0], [1], [0, 0, 1, 1], [], []>} : vector<8x512xf32>, vector<512x128xf32>, vector<8x128xf32> -> vector<8x128xf32>
    %c0_4 = arith.constant 0 : index
    %c0_5 = arith.constant 0 : index
    %6 = vector.load %arg4[%c0_4, %c0_5] : memref<1x128xf32, #tpu.memory_space<vmem>>, vector<1x128xf32>
    %7 = vector.broadcast %6 : vector<1x128xf32> to vector<8x128xf32>
    %8 = arith.addf %5, %7 : vector<8x128xf32>
    %c0_6 = arith.constant 0 : index
    %c0_7 = arith.constant 0 : index
    %9 = vector.load %arg5[%c0_6, %c0_7] : memref<8x128xf32, #tpu.memory_space<vmem>>, vector<8x128xf32>
    tpu.vector_store %arg5[%c0_6, %c0_7], %8 {strides = array<i32>} : memref<8x128xf32, #tpu.memory_space<vmem>>, vector<8x128xf32>,
    return
  }
  func.func @transform_0(%arg0: i32, %arg1: i32) -> (i32, i32) {
    %c0_i32 = arith.constant 0 : i32
    %c0_i32_0 = arith.constant 0 : i32
    return %arg0, %c0_i32 : i32, i32
  }
  func.func @transform_1(%arg0: i32, %arg1: i32) -> (i32, i32) {
    %c0_i32 = arith.constant 0 : i32
    %c0_i32_0 = arith.constant 0 : i32
    return %c0_i32, %arg1 : i32, i32
  }
  func.func @transform_2(%arg0: i32, %arg1: i32) -> (i32, i32) {
    %c0_i32 = arith.constant 0 : i32
    %c0_i32_0 = arith.constant 0 : i32
    return %c0_i32, %arg1 : i32, i32
  }
  func.func @transform_3(%arg0: i32, %arg1: i32) -> (i32, i32) {
    %c0_i32 = arith.constant 0 : i32
    return %arg0, %arg1 : i32, i32
  }
}

</mosaic_0001>

<llo_original>
// kernel: tpu_custom_call.1
$region0: #{tpu_custom_call.1}
  #allocation0 [shape = 'u32[]', space=smem, size = 0x4, offset = 0x4, fixed_abs, tag = 'smem constant byte address 0x4 - core index']
  #allocation1 [shape = 'u32[144,128]{1,0:T(1,128)}', space=vmem, size = 0x12000, scoped, tag = 'internal scratch']
  #allocation2 [shape = 'f32[8,512]{1,0:T(8,128)}', space=vmem, size = 0x4000, scoped, tag = 'scratch operand']
  %s0 = inlined_call_operand.hbm [shape: f32[8,128], index: 0, kind: input, shape index: {}]
  %s1 = inlined_call_operand.hbm [shape: f32[512,128], index: 1, kind: input, shape index: {}]
  %s2 = inlined_call_operand.vmem [shape: f32[1,128], index: 2, kind: input, shape index: {}]
  %s3 = inlined_call_operand.hbm [shape: f32[8,128], index: 3, kind: output, shape index: {}]
  %s4 = sld [smem:[#allocation0]]
  $region34: #{tpu_custom_call.1} parent=0
    _
  %s6 = ssub.s32 1, %s4
  %s7 = scalar_select 0, %s6, %s4
  $region1: #{tpu_custom_call.1} parent=0
    #allocation3 [shape = 'u8[4096]{0}', space=vmem, size = 0x1000, scoped, tag = 'input window, operand 0, single buffered']
    #allocation4 [shape = 's32[1]{0}', space=sflag, size = 0x4, scoped, tag = 'scoped memory for tpu_custom_call.1']
    #allocation5 [shape = 's32[1]{0}', space=sflag, size = 0x4, scoped, tag = 'scoped memory for tpu_custom_call.1']
    #allocation6 [shape = 'u8[262144]{0}', space=vmem, size = 0x40000, scoped, tag = 'input window, operand 1, single buffered']
    #allocation7 [shape = 's32[1]{0}', space=sflag, size = 0x4, scoped, tag = 'scoped memory for tpu_custom_call.1']
    #allocation8 [shape = 'u8[4096]{0}', space=vmem, size = 0x1000, scoped, tag = 'output window, operand 0, single buffered']
    %8 = vsyncpa [#allocation4], 0
    %9 = vsyncpa [#allocation7], 0
    %10 = vsyncpa [#allocation5], 0
    // Predicated region
    $region2: #{tpu_custom_call.1} parent=1 // pred_check
      _
    $region3: #{tpu_custom_call.1} parent=1 // pred_check_branch
      %12 = sbr.rel (0) target = $region5
    $region4: #{tpu_custom_call.1} parent=1 // pred_region
      %s14 = ssub.s32 128, 128
      %15 = vsyncadd [#allocation4], %s14
      %s17 = sshll.u32 [#allocation3], 4
      %s18 = int_to_ptr.vmem [resolvable:$true] %s17
      %20 = dma.hbm_to_vmem [thread:$0]  %s0, 128, %s18, [#allocation4]
    $region5: #{tpu_custom_call.1} parent=1 // pred_fallthru
      _
    // Predicated region
    $region6: #{tpu_custom_call.1} parent=1 // pred_check
      _
    $region7: #{tpu_custom_call.1} parent=1 // pred_check_branch
      %22 = sbr.rel (0) target = $region9
    $region8: #{tpu_custom_call.1} parent=1 // pred_region
      %s24 = ssub.s32 8192, 8192
      %25 = vsyncadd [#allocation7], %s24
      %s26 = sshll.u32 [#allocation6], 4
      %s27 = int_to_ptr.vmem [resolvable:$true] %s26
      %32 = dma.hbm_to_vmem [thread:$0]  %s1, 8192, %s27, [#allocation7], 128, 128, 8
    $region9: #{tpu_custom_call.1} parent=1 // pred_fallthru
      _
    // Predicated region
    $region10: #{tpu_custom_call.1} parent=1 // pred_check
      _
    $region11: #{tpu_custom_call.1} parent=1 // pred_check_branch
      %34 = sbr.rel (0) target = $region13
    $region12: #{tpu_custom_call.1} parent=1 // pred_region
      _
    $region13: #{tpu_custom_call.1} parent=1 // pred_fallthru
      _
    // Predicated region
    $region14: #{tpu_custom_call.1} parent=1 // pred_check
      _
    $region15: #{tpu_custom_call.1} parent=1 // pred_check_branch
      %36 = sbr.rel (0) target = $region17
    $region16: #{tpu_custom_call.1} parent=1 // pred_region
      %37 = dma.done [#allocation4], 128
    $region17: #{tpu_custom_call.1} parent=1 // pred_fallthru
      _
    // Predicated region
    $region18: #{tpu_custom_call.1} parent=1 // pred_check
      _
    $region19: #{tpu_custom_call.1} parent=1 // pred_check_branch
      %39 = sbr.rel (0) target = $region21
    $region20: #{tpu_custom_call.1} parent=1 // pred_region
      %40 = dma.done [#allocation7], 8192
    $region21: #{tpu_custom_call.1} parent=1 // pred_fallthru
      _
    %p41 = scmp.eq.s32.totalorder 0, 0
    // Predicated region
    $region22: #{tpu_custom_call.1} parent=1 // pred_check
      %p42 = pneg %p41
    $region23: #{tpu_custom_call.1} parent=1 // pred_check_branch
      %44 = sbr.rel (%p42) target = $region25
    $region24: #{tpu_custom_call.1} parent=1 // pred_region
      %v45 = vld [vmem:[#allocation3] sm:$0xff]
      %v46 = vtanh.pop %v45
      %47 = vst [vmem:[#allocation2] sm:$0xff] %v46
      %v48 = vmul.f32 %v46, 4.0
      %v49 = vadd.f32 %v48, 0.0
      %v50 = vmul.f32 %v49, 0.5
      %v51 = vmul.f32 %v46, 1.875
      %v52 = vmul.f32 %v51, %v50
      %v53 = vsub.f32 %v52, 0.75
      %54 = vst [vmem:[#allocation2 + $0x8] sm:$0xff] %v53
      %v55 = vmul.f32 %v46, 1.8666667
      %v56 = vmul.f32 %v55, %v53
      %v57 = vmul.f32 %v50, 0.8
      %v58 = vsub.f32 %v56, %v57
      %59 = vst [vmem:[#allocation2 + $0x10] sm:$0xff] %v58
      %v60 = vmul.f32 %v51, %v58
      %v61 = vmul.f32 %v53, 0.8333333
      %v62 = vsub.f32 %v60, %v61
      %63 = vst [vmem:[#allocation2 + $0x18] sm:$0xff] %v62
    $region25: #{tpu_custom_call.1} parent=1 // pred_fallthru
      _
    %v64 = vld [vmem:[#allocation2] sm:$0xff]
    %v65 = vld [vmem:[#allocation2 + $0x8] sm:$0xff]
    %v66 = vld [vmem:[#allocation2 + $0x10] sm:$0xff]
    %v67 = vld [vmem:[#allocation2 + $0x18] sm:$0xff]
    %v68 = vld [vmem:[#allocation6] sm:$0xff]
    %v69 = vld [vmem:[#allocation6 + $0x8] sm:$0xff]
    %v70 = vld [vmem:[#allocation6 + $0x10] sm:$0xff]
    %v71 = vld [vmem:[#allocation6 + $0x18] sm:$0xff]
    %v72 = vld [vmem:[#allocation6 + $0x20] sm:$0xff]
    %v73 = vld [vmem:[#allocation6 + $0x28] sm:$0xff]
    %v74 = vld [vmem:[#allocation6 + $0x30] sm:$0xff]
    %v75 = vld [vmem:[#allocation6 + $0x38] sm:$0xff]
    %v76 = vld [vmem:[#allocation6 + $0x40] sm:$0xff]
    %v77 = vld [vmem:[#allocation6 + $0x48] sm:$0xff]
    %v78 = vld [vmem:[#allocation6 + $0x50] sm:$0xff]
    %v79 = vld [vmem:[#allocation6 + $0x58] sm:$0xff]
    %v80 = vld [vmem:[#allocation6 + $0x60] sm:$0xff]
    %v81 = vld [vmem:[#allocation6 + $0x68] sm:$0xff]
    %v82 = vld [vmem:[#allocation6 + $0x70] sm:$0xff]
    %v83 = vld [vmem:[#allocation6 + $0x78] sm:$0xff]
    %v84 = vld [vmem:[#allocation6 + $0x80] sm:$0xff]
    %v85 = vld [vmem:[#allocation6 + $0x88] sm:$0xff]
    %v86 = vld [vmem:[#allocation6 + $0x90] sm:$0xff]
    %v87 = vld [vmem:[#allocation6 + $0x98] sm:$0xff]
    %v88 = vld [vmem:[#allocation6 + $0xa0] sm:$0xff]
    %v89 = vld [vmem:[#allocation6 + $0xa8] sm:$0xff]
    %v90 = vld [vmem:[#allocation6 + $0xb0] sm:$0xff]
    %v91 = vld [vmem:[#allocation6 + $0xb8] sm:$0xff]
    %v92 = vld [vmem:[#allocation6 + $0xc0] sm:$0xff]
    %v93 = vld [vmem:[#allocation6 + $0xc8] sm:$0xff]
    %v94 = vld [vmem:[#allocation6 + $0xd0] sm:$0xff]
    %v95 = vld [vmem:[#allocation6 + $0xd8] sm:$0xff]
    %v96 = vld [vmem:[#allocation6 + $0xe0] sm:$0xff]
    %v97 = vld [vmem:[#allocation6 + $0xe8] sm:$0xff]
    %v98 = vld [vmem:[#allocation6 + $0xf0] sm:$0xff]
    %v99 = vld [vmem:[#allocation6 + $0xf8] sm:$0xff]
    %v100 = vld [vmem:[#allocation6 + $0x100] sm:$0xff]
    %v101 = vld [vmem:[#allocation6 + $0x108] sm:$0xff]
    %v102 = vld [vmem:[#allocation6 + $0x110] sm:$0xff]
    %v103 = vld [vmem:[#allocation6 + $0x118] sm:$0xff]
    %v104 = vld [vmem:[#allocation6 + $0x120] sm:$0xff]
    %v105 = vld [vmem:[#allocation6 + $0x128] sm:$0xff]
    %v106 = vld [vmem:[#allocation6 + $0x130] sm:$0xff]
    %v107 = vld [vmem:[#allocation6 + $0x138] sm:$0xff]
    %v108 = vld [vmem:[#allocation6 + $0x140] sm:$0xff]
    %v109 = vld [vmem:[#allocation6 + $0x148] sm:$0xff]
    %v110 = vld [vmem:[#allocation6 + $0x150] sm:$0xff]
    %v111 = vld [vmem:[#allocation6 + $0x158] sm:$0xff]
    %v112 = vld [vmem:[#allocation6 + $0x160] sm:$0xff]
    %v113 = vld [vmem:[#allocation6 + $0x168] sm:$0xff]
    %v114 = vld [vmem:[#allocation6 + $0x170] sm:$0xff]
    %v115 = vld [vmem:[#allocation6 + $0x178] sm:$0xff]
    %v116 = vld [vmem:[#allocation6 + $0x180] sm:$0xff]
    %v117 = vld [vmem:[#allocation6 + $0x188] sm:$0xff]
    %v118 = vld [vmem:[#allocation6 + $0x190] sm:$0xff]
    %v119 = vld [vmem:[#allocation6 + $0x198] sm:$0xff]
    %v120 = vld [vmem:[#allocation6 + $0x1a0] sm:$0xff]
    %v121 = vld [vmem:[#allocation6 + $0x1a8] sm:$0xff]
    %v122 = vld [vmem:[#allocation6 + $0x1b0] sm:$0xff]
    %v123 = vld [vmem:[#allocation6 + $0x1b8] sm:$0xff]
    %v124 = vld [vmem:[#allocation6 + $0x1c0] sm:$0xff]
    %v125 = vld [vmem:[#allocation6 + $0x1c8] sm:$0xff]
    %v126 = vld [vmem:[#allocation6 + $0x1d0] sm:$0xff]
    %v127 = vld [vmem:[#allocation6 + $0x1d8] sm:$0xff]
    %v128 = vld [vmem:[#allocation6 + $0x1e0] sm:$0xff]
    %v129 = vld [vmem:[#allocation6 + $0x1e8] sm:$0xff]
    %v130 = vld [vmem:[#allocation6 + $0x1f0] sm:$0xff]
    %v131 = vld [vmem:[#allocation6 + $0x1f8] sm:$0xff]
    %v132 = vld [vmem:[%s2] sm:$0x1]
    %v134 = vlaneseq
    %v135 = vshrl.u32 %v134, 7
    %v136 = vsub.s32 0, %v135
    %v137 = vrot.slane %v132, %v136
    %139 = vmatprep.subr.mxu0 0.0
    %140 = vmatpush1.msra.mxu0 %v68
    %141 = vmatprep.subr.mxu0 0.0
    %142 = vmatpush1.msra.mxu0 %v69
    %143 = vmatprep.subr.mxu0 0.0
    %144 = vmatpush1.msra.mxu0 %v70
    %145 = vmatprep.subr.mxu0 0.0
    %146 = vmatpush1.msra.mxu0 %v71
    %147 = vmatprep.subr.mxu0 0.0
    %148 = vmatpush1.msra.mxu0 %v72
    %149 = vmatprep.subr.mxu0 0.0
    %150 = vmatpush1.msra.mxu0 %v73
    %151 = vmatprep.subr.mxu0 0.0
    %152 = vmatpush1.msra.mxu0 %v74
    %153 = vmatprep.subr.mxu0 0.0
    %154 = vmatpush1.msra.mxu0 %v75
    %155 = vmatprep.subr.mxu0 0.0
    %156 = vmatpush1.msra.mxu0 %v76
    %157 = vmatprep.subr.mxu0 0.0
    %158 = vmatpush1.msra.mxu0 %v77
    %159 = vmatprep.subr.mxu0 0.0
    %160 = vmatpush1.msra.mxu0 %v78
    %161 = vmatprep.subr.mxu0 0.0
    %162 = vmatpush1.msra.mxu0 %v79
    %163 = vmatprep.subr.mxu0 0.0
    %164 = vmatpush1.msra.mxu0 %v80
    %165 = vmatprep.subr.mxu0 0.0
    %166 = vmatpush1.msra.mxu0 %v81
    %167 = vmatprep.subr.mxu0 0.0
    %168 = vmatpush1.msra.mxu0 %v82
    %169 = vmatprep.subr.mxu0 0.0
    %170 = vmatpush1.msra.mxu0 %v83
    %171 = vmatprep.subr.mxu0 0.0
    %172 = vmatpush1.msra.mxu0 %v84
    %173 = vmatprep.subr.mxu0 0.0
    %174 = vmatpush1.msra.mxu0 %v85
    %175 = vmatprep.subr.mxu0 0.0
    %176 = vmatpush1.msra.mxu0 %v86
    %177 = vmatprep.subr.mxu0 0.0
    %178 = vmatpush1.msra.mxu0 %v87
    %179 = vmatprep.subr.mxu0 0.0
    %180 = vmatpush1.msra.mxu0 %v88
    %181 = vmatprep.subr.mxu0 0.0
    %182 = vmatpush1.msra.mxu0 %v89
    %183 = vmatprep.subr.mxu0 0.0
    %184 = vmatpush1.msra.mxu0 %v90
    %185 = vmatprep.subr.mxu0 0.0
    %186 = vmatpush1.msra.mxu0 %v91
    %187 = vmatprep.subr.mxu0 0.0
    %188 = vmatpush1.msra.mxu0 %v92
    %189 = vmatprep.subr.mxu0 0.0
    %190 = vmatpush1.msra.mxu0 %v93
    %191 = vmatprep.subr.mxu0 0.0
    %192 = vmatpush1.msra.mxu0 %v94
    %193 = vmatprep.subr.mxu0 0.0
    %194 = vmatpush1.msra.mxu0 %v95
    %195 = vmatprep.subr.mxu0 0.0
    %196 = vmatpush1.msra.mxu0 %v96
    %197 = vmatprep.subr.mxu0 0.0
    %198 = vmatpush1.msra.mxu0 %v97
    %199 = vmatprep.subr.mxu0 0.0
    %200 = vmatpush1.msra.mxu0 %v98
    %201 = vmatprep.subr.mxu0 0.0
    %202 = vmatpush1.msra.mxu0 %v99
    %203 = vmatprep.mubr.f32.mxu0 %v65
    %204 = vmatmul.mubr.f32.gmra.mrb[0].mxu0 %v64
    %v205 = vpop.f32.mrb[0].mxu0
    %v206 = vadd.f32 %v137, %v205
    %v207 = vpop.f32.mrb[0].mxu0
    %208 = vdwg.mxu0
    %209 = vmatprep.subr.mxu0 0.0
    %210 = vmatpush1.msra.mxu0 %v100
    %211 = vmatprep.subr.mxu0 0.0
    %212 = vmatpush1.msra.mxu0 %v101
    %213 = vmatprep.subr.mxu0 0.0
    %214 = vmatpush1.msra.mxu0 %v102
    %215 = vmatprep.subr.mxu0 0.0
    %216 = vmatpush1.msra.mxu0 %v103
    %217 = vmatprep.subr.mxu0 0.0
    %218 = vmatpush1.msra.mxu0 %v104
    %219 = vmatprep.subr.mxu0 0.0
    %220 = vmatpush1.msra.mxu0 %v105
    %221 = vmatprep.subr.mxu0 0.0
    %222 = vmatpush1.msra.mxu0 %v106
    %223 = vmatprep.subr.mxu0 0.0
    %224 = vmatpush1.msra.mxu0 %v107
    %225 = vmatprep.subr.mxu0 0.0
    %226 = vmatpush1.msra.mxu0 %v108
    %227 = vmatprep.subr.mxu0 0.0
    %228 = vmatpush1.msra.mxu0 %v109
    %229 = vmatprep.subr.mxu0 0.0
    %230 = vmatpush1.msra.mxu0 %v110
    %231 = vmatprep.subr.mxu0 0.0
    %232 = vmatpush1.msra.mxu0 %v111
    %233 = vmatprep.subr.mxu0 0.0
    %234 = vmatpush1.msra.mxu0 %v112
    %235 = vmatprep.subr.mxu0 0.0
    %236 = vmatpush1.msra.mxu0 %v113
    %237 = vmatprep.subr.mxu0 0.0
    %238 = vmatpush1.msra.mxu0 %v114
    %239 = vmatprep.subr.mxu0 0.0
    %240 = vmatpush1.msra.mxu0 %v115
    %241 = vmatprep.subr.mxu0 0.0
    %242 = vmatpush1.msra.mxu0 %v116
    %243 = vmatprep.subr.mxu0 0.0
    %244 = vmatpush1.msra.mxu0 %v117
    %245 = vmatprep.subr.mxu0 0.0
    %246 = vmatpush1.msra.mxu0 %v118
    %247 = vmatprep.subr.mxu0 0.0
    %248 = vmatpush1.msra.mxu0 %v119
    %249 = vmatprep.subr.mxu0 0.0
    %250 = vmatpush1.msra.mxu0 %v120
    %251 = vmatprep.subr.mxu0 0.0
    %252 = vmatpush1.msra.mxu0 %v121
    %253 = vmatprep.subr.mxu0 0.0
    %254 = vmatpush1.msra.mxu0 %v122
    %255 = vmatprep.subr.mxu0 0.0
    %256 = vmatpush1.msra.mxu0 %v123
    %257 = vmatprep.subr.mxu0 0.0
    %258 = vmatpush1.msra.mxu0 %v124
    %259 = vmatprep.subr.mxu0 0.0
    %260 = vmatpush1.msra.mxu0 %v125
    %261 = vmatprep.subr.mxu0 0.0
    %262 = vmatpush1.msra.mxu0 %v126
    %263 = vmatprep.subr.mxu0 0.0
    %264 = vmatpush1.msra.mxu0 %v127
    %265 = vmatprep.subr.mxu0 0.0
    %266 = vmatpush1.msra.mxu0 %v128
    %267 = vmatprep.subr.mxu0 0.0
    %268 = vmatpush1.msra.mxu0 %v129
    %269 = vmatprep.subr.mxu0 0.0
    %270 = vmatpush1.msra.mxu0 %v130
    %271 = vmatprep.subr.mxu0 0.0
    %272 = vmatpush1.msra.mxu0 %v131
    %273 = vmatprep.mubr.f32.mxu0 %v67
    %274 = vmatmul.mubr.f32.gmra.mrb[0].mxu0 %v66
    %v275 = vpop.f32.mrb[0].mxu0
    %v276 = vadd.f32 %v206, %v275
    %v277 = vpop.f32.mrb[0].mxu0
    %278 = vdwg.mxu0
    %279 = vst [vmem:[#allocation8] sm:$0xff] %v276
    // Predicated region
    $region26: #{tpu_custom_call.1} parent=1 // pred_check
      _
    $region27: #{tpu_custom_call.1} parent=1 // pred_check_branch
      %281 = sbr.rel (0) target = $region29
    $region28: #{tpu_custom_call.1} parent=1 // pred_region
      %s283 = ssub.s32 128, 128
      %284 = vsyncadd [#allocation5], %s283
      %s286 = sshll.u32 [#allocation8], 4
      %s287 = int_to_ptr.vmem [resolvable:$true] %s286
      %289 = dma.vmem_to_hbm [thread:$0]  %s287, 128, %s3, [#allocation5]
    $region29: #{tpu_custom_call.1} parent=1 // pred_fallthru
      _
    // Predicated region
    $region30: #{tpu_custom_call.1} parent=1 // pred_check
      _
    $region31: #{tpu_custom_call.1} parent=1 // pred_check_branch
      %291 = sbr.rel (0) target = $region33
    $region32: #{tpu_custom_call.1} parent=1 // pred_region
      %292 = dma.done [#allocation5], 128
    $region33: #{tpu_custom_call.1} parent=1 // pred_fallthru
      _
    %293 = vsyncpa [#allocation4], 1
    %294 = vsyncpa [#allocation7], 1
    %295 = vsyncpa [#allocation5], 1

</llo_original>
